<compile_context>
chip_gen: v6e
topology: v6e:2x2x1
jax: 0.10.0
libtpu: 0.0.40
codegen_flags: <defaults>
</compile_context>

<pallas_src>
import jax
import jax.numpy as jnp
from jax.experimental import pallas as pl
from jax.experimental.pallas import tpu as pltpu


# ---------------------------------------------------------------------------
# Kernel
# ---------------------------------------------------------------------------
def _make_mlp_kernel(act_dtype):
    """act_dtype: dtype tanh is evaluated in (bf16 on v6e/v7x, f32 on v5e)."""

    def kernel(x_ref,
               w1_ref, b1_ref,
               w2_ref, b2_ref,
               w3_ref, b3_ref,
               w4_ref, b4_ref,
               o_ref):
        def tanh_layer(h, w_ref, b_ref):
            # bf16 matmul on the MXU, f32 accumulate, f32 bias add, then tanh in
            # act_dtype; the activation feeds the next MXU pass as bf16.
            z = jnp.dot(h, w_ref[...], preferred_element_type=jnp.float32) + b_ref[...]
            return jnp.tanh(z.astype(act_dtype)).astype(jnp.bfloat16)

        h = tanh_layer(x_ref[...], w1_ref, b1_ref)   # (tb, H1p)
        h = tanh_layer(h,          w2_ref, b2_ref)   # (tb, H2p)
        h = tanh_layer(h,          w3_ref, b3_ref)   # (tb, H3p)

        # Final Linear(H3 -> 1): VPU multiply + cross-lane (XLU) reduction,
        # packed lane-dense: the 128 rows of each group land on the 128-lane
        # axis of the output block -> unmasked vector stores, tiny out buffer.
        prod = h.astype(jnp.float32) * w4_ref[...]               # (tb, H3p) f32
        tb = prod.shape[0]
        grp = prod.reshape(tb // 128, 128, prod.shape[1])        # (tb//128,128,H3p)
        o_ref[...] = jnp.sum(grp, axis=-1) + b4_ref[...]         # (tb//128,128)+(1,1)

    return kernel


# ---------------------------------------------------------------------------
# Parameter handling
# ---------------------------------------------------------------------------
def _round_up(d, m=128):
    return ((d + m - 1) // m) * m


def _default_act_dtype():
    """bf16 tanh on bf16-EUP chips (v6e/v7x); f32 on older chips (<= v5)."""
    try:
        kind = jax.devices()[0].device_kind.lower()
    except Exception:
        return jnp.bfloat16
    for tag in ("v2", "v3", "v4", "v5"):
        if tag in kind:
            return jnp.float32
    return jnp.bfloat16


def init_params(key, cbits, n_stages):
    """Deterministic synthetic params, shapes matching the PyTorch module.
    Weights are [in, out]; uniform(-1/sqrt(in), +1/sqrt(in)) like nn.Linear."""
    h_half = int(2 ** n_stages / 2)
    h_full = int(2 ** n_stages)
    dims = [(cbits, h_half), (h_half, h_full), (h_full, h_half), (h_half, 1)]
    params = {}
    for i, (fan_in, fan_out) in enumerate(dims, start=1):
        key, kw, kb = jax.random.split(key, 3)
        bound = 1.0 / (fan_in ** 0.5)
        params[f"w{i}"] = jax.random.uniform(
            kw, (fan_in, fan_out), jnp.float32, -bound, bound)
        params[f"b{i}"] = jax.random.uniform(
            kb, (1, fan_out), jnp.float32, -bound, bound)
    return params


def prepare_kernel_params(params):
    """Pad hidden dims to multiples of 128 (zero padding => math unchanged),
    cast matmul weights to bf16, keep biases (and the tiny final layer) f32."""
    w1, b1 = params["w1"], params["b1"]
    w2, b2 = params["w2"], params["b2"]
    w3, b3 = params["w3"], params["b3"]
    w4, b4 = params["w4"], params["b4"]

    h1p = _round_up(w1.shape[1])
    h2p = _round_up(w2.shape[1])
    h3p = _round_up(w3.shape[1])

    def pad2(a, rows, cols):
        return jnp.pad(a, ((0, rows - a.shape[0]), (0, cols - a.shape[1])))

    kp = {
        "w1": pad2(w1, w1.shape[0], h1p).astype(jnp.bfloat16),
        "b1": pad2(b1, 1, h1p),                       # f32
        "w2": pad2(w2, h1p, h2p).astype(jnp.bfloat16),
        "b2": pad2(b2, 1, h2p),
        "w3": pad2(w3, h2p, h3p).astype(jnp.bfloat16),
        "b3": pad2(b3, 1, h3p),
        "w4": pad2(w4.T, 1, h3p),                     # (1, H3p) f32 row for VPU reduce
        "b4": b4,                                     # (1, 1) f32
    }
    return kp, (h1p, h2p, h3p)


# ---------------------------------------------------------------------------
# Wrapper
# ---------------------------------------------------------------------------
def mursi2020_forward(x, params, tile_b=8192, act_dtype=None):
    """x: [B, cbits] float32; params: dict from init_params.
    Returns [B] float32 (scalar when B == 1, matching PyTorch .squeeze())."""
    B, cbits = x.shape
    if act_dtype is None:
        act_dtype = _default_act_dtype()
    kp, (h1p, h2p, h3p) = prepare_kernel_params(params)

    # Batch tile: lane-dense output packs 128 rows per output lane-row, so the
    # batch is padded to a multiple of 128 (single tile) or of 1024 (multi-tile,
    # keeping the (tb//128, 128) output block (8,128)-legal).
    if B <= tile_b:
        tb = _round_up(max(B, 1), 128)
        Bp = tb
    else:
        tb = _round_up(tile_b, 1024)
        Bp = pl.cdiv(B, tb) * tb

    xk = x.astype(jnp.bfloat16)
    if Bp != B:
        xk = jnp.pad(xk, ((0, Bp - B), (0, 0)))

    args = (xk, kp["w1"], kp["b1"], kp["w2"], kp["b2"],
            kp["w3"], kp["b3"], kp["w4"], kp["b4"])

    # Weights/biases: full-array blocks, constant index_map -> VMEM-resident.
    resident = lambda a: pl.BlockSpec(a.shape, lambda i: (0,) * a.ndim)

    param_bytes = sum(int(a.size) * a.dtype.itemsize for a in args[1:])
    cost = pl.CostEstimate(
        flops=int(2 * Bp * (cbits * h1p + h1p * h2p + h2p * h3p + h3p)),
        transcendentals=int(Bp * (h1p + h2p + h3p)),
        bytes_accessed=int(Bp * cbits * 2 + Bp * 4 + param_bytes),
    )

    out = pl.pallas_call(
        _make_mlp_kernel(act_dtype),
        out_shape=jax.ShapeDtypeStruct((Bp // 128, 128), jnp.float32),
        grid=(Bp // tb,),
        in_specs=[pl.BlockSpec((tb, cbits), lambda i: (i, 0))]
                 + [resident(a) for a in args[1:]],
        out_specs=pl.BlockSpec((tb // 128, 128), lambda i: (i, 0)),
        compiler_params=pltpu.CompilerParams(
            dimension_semantics=("parallel",),       # megacore sharding on v7x
            vmem_limit_bytes=48 * 1024 * 1024),      # > v5e 16MiB / v6e 32MiB defaults,
                                                     # < v7x 64MiB physical per TC
        cost_estimate=cost,
    )(*args)

    y = out.reshape(-1)[:B]
    # PyTorch .squeeze() also drops the batch dim when B == 1.
    if B == 1:
        return y[0]
    return y
    # TODO(synk): inputs with >2 leading dims (allowed by nn.Linear) would need a
    # flatten/unflatten around this wrapper.


# ---------------------------------------------------------------------------
# References
# ---------------------------------------------------------------------------
def reference_forward_mirror(x, params, act_dtype=jnp.bfloat16):
    """Mirrors the kernel's numerics: bf16 inputs/weights, f32 accumulate,
    tanh evaluated in act_dtype, bf16 activations between layers."""
    h = x.astype(jnp.bfloat16)
    for i in (1, 2, 3):
        w = params[f"w{i}"].astype(jnp.bfloat16)
        z = jnp.dot(h, w, preferred_element_type=jnp.float32) + params[f"b{i}"]
        h = jnp.tanh(z.astype(act_dtype)).astype(jnp.bfloat16)
    out = h.astype(jnp.float32) @ params["w4"] + params["b4"]
    return jnp.squeeze(out, axis=-1)


def reference_forward_f32(x, params):
    h = jnp.tanh(x @ params["w1"] + params["b1"])
    h = jnp.tanh(h @ params["w2"] + params["b2"])
    h = jnp.tanh(h @ params["w3"] + params["b3"])
    return jnp.squeeze(h @ params["w4"] + params["b4"], axis=-1)


# ---------------------------------------------------------------------------
if __name__ == "__main__":
    cbits = 64       # challenge bits
    n_stages = 6     # -> hidden sizes 32, 64, 32
    batch = 8

    key = jax.random.PRNGKey(0)
    key, kx = jax.random.split(key)
    x = jax.random.normal(kx, (batch, cbits), jnp.float32)
    params = init_params(key, cbits, n_stages)

    act_dtype = _default_act_dtype()

    # Single-tile path (B padded up to 128 rows, padded rows sliced off).
    y = jax.block_until_ready(mursi2020_forward(x, params))
    assert y.shape == (batch,), y.shape
    y_mirror = reference_forward_mirror(x, params, act_dtype)
    assert jnp.allclose(y, y_mirror, atol=5e-2), (y, y_mirror)
    assert jnp.allclose(y, reference_forward_f32(x, params), atol=1.5e-1)

    # Multi-tile grid + tail-padding path: 2500 rows, 3 tiles of 1024 (572 padded).
    key, kx2 = jax.random.split(key)
    x2 = jax.random.normal(kx2, (2500, cbits), jnp.float32)
    y2 = jax.block_until_ready(mursi2020_forward(x2, params, tile_b=1024))
    assert y2.shape == (2500,), y2.shape
    y2_mirror = reference_forward_mirror(x2, params, act_dtype)
    assert jnp.allclose(y2, y2_mirror, atol=5e-2), \
        float(jnp.max(jnp.abs(y2 - y2_mirror)))
    assert jnp.allclose(y2, reference_forward_f32(x2, params), atol=1.5e-1)

    print("KERNEL_OK")
</pallas_src>

<mosaic_0001>
module attributes {stable_mosaic.version = 11 : i64} {
  func.func @kernel(%arg0: i32, %arg1: memref<128x64xbf16, #tpu.memory_space<vmem>>, %arg2: memref<64x128xbf16, #tpu.memory_space<vmem>>, %arg3: memref<1x128xf32, #tpu.memory_space<vmem>>, %arg4: memref<128x128xbf16, #tpu.memory_space<vmem>>, %arg5: memref<1x128xf32, #tpu.memory_space<vmem>>, %arg6: memref<128x128xbf16, #tpu.memory_space<vmem>>, %arg7: memref<1x128xf32, #tpu.memory_space<vmem>>, %arg8: memref<1x128xf32, #tpu.memory_space<vmem>>, %arg9: memref<1x1xf32, #tpu.memory_space<vmem>>, %arg10: memref<1x128xf32, #tpu.memory_space<vmem>>) attributes {dimension_semantics = [#tpu.dimension_semantics<parallel>], iteration_bounds = array<i64: 1>, scalar_prefetch = 0 : i64, scratch_operands = 0 : i64, tpu.core_type = #tpu.core_type<tc>, window_params = [{transform_indices = @transform_0, window_bounds = array<i64: 128, 64>}, {pipeline_mode = #tpu.pipeline_mode<synchronous>, transform_indices = @transform_1, window_bounds = array<i64: 64, 128>}, {pipeline_mode = #tpu.pipeline_mode<synchronous>, transform_indices = @transform_2, window_bounds = array<i64: 1, 128>}, {pipeline_mode = #tpu.pipeline_mode<synchronous>, transform_indices = @transform_3, window_bounds = array<i64: 128, 128>}, {pipeline_mode = #tpu.pipeline_mode<synchronous>, transform_indices = @transform_4, window_bounds = array<i64: 1, 128>}, {pipeline_mode = #tpu.pipeline_mode<synchronous>, transform_indices = @transform_5, window_bounds = array<i64: 128, 128>}, {pipeline_mode = #tpu.pipeline_mode<synchronous>, transform_indices = @transform_6, window_bounds = array<i64: 1, 128>}, {pipeline_mode = #tpu.pipeline_mode<synchronous>, transform_indices = @transform_7, window_bounds = array<i64: 1, 128>}, {pipeline_mode = #tpu.pipeline_mode<synchronous>, transform_indices = @transform_8, window_bounds = array<i64: 1, 1>}, {transform_indices = @transform_9, window_bounds = array<i64: 1, 128>}]} {
    %c0 = arith.constant 0 : index
    %c0_0 = arith.constant 0 : index
    %0 = vector.load %arg1[%c0, %c0_0] : memref<128x64xbf16, #tpu.memory_space<vmem>>, vector<128x64xbf16>
    %c0_1 = arith.constant 0 : index
    %c0_2 = arith.constant 0 : index
    %1 = vector.load %arg2[%c0_1, %c0_2] : memref<64x128xbf16, #tpu.memory_space<vmem>>, vector<64x128xbf16>
    %cst = arith.constant dense<0.000000e+00> : vector<128x128xf32>
    %2 = tpu.matmul %0, %1, %cst {dimension_numbers = #tpu.dot_dimension_numbers<[1], [0], [0], [1], [0, 0, 1, 1], [], []>} : vector<128x64xbf16>, vector<64x128xbf16>, vector<128x128xf32> -> vector<128x128xf32>
    %c0_3 = arith.constant 0 : index
    %c0_4 = arith.constant 0 : index
    %3 = vector.load %arg3[%c0_3, %c0_4] : memref<1x128xf32, #tpu.memory_space<vmem>>, vector<1x128xf32>
    %4 = vector.broadcast %3 : vector<1x128xf32> to vector<128x128xf32>
    %5 = arith.addf %2, %4 : vector<128x128xf32>
    %6 = arith.truncf %5 : vector<128x128xf32> to vector<128x128xbf16>
    %7 = math.tanh %6 : vector<128x128xbf16>
    %c0_5 = arith.constant 0 : index
    %c0_6 = arith.constant 0 : index
    %8 = vector.load %arg4[%c0_5, %c0_6] : memref<128x128xbf16, #tpu.memory_space<vmem>>, vector<128x128xbf16>
    %cst_7 = arith.constant dense<0.000000e+00> : vector<128x128xf32>
    %9 = tpu.matmul %7, %8, %cst_7 {dimension_numbers = #tpu.dot_dimension_numbers<[1], [0], [0], [1], [0, 0, 1, 1], [], []>} : vector<128x128xbf16>, vector<128x128xbf16>, vector<128x128xf32> -> vector<128x128xf32>
    %c0_8 = arith.constant 0 : index
    %c0_9 = arith.constant 0 : index
    %10 = vector.load %arg5[%c0_8, %c0_9] : memref<1x128xf32, #tpu.memory_space<vmem>>, vector<1x128xf32>
    %11 = vector.broadcast %10 : vector<1x128xf32> to vector<128x128xf32>
    %12 = arith.addf %9, %11 : vector<128x128xf32>
    %13 = arith.truncf %12 : vector<128x128xf32> to vector<128x128xbf16>
    %14 = math.tanh %13 : vector<128x128xbf16>
    %c0_10 = arith.constant 0 : index
    %c0_11 = arith.constant 0 : index
    %15 = vector.load %arg6[%c0_10, %c0_11] : memref<128x128xbf16, #tpu.memory_space<vmem>>, vector<128x128xbf16>
    %cst_12 = arith.constant dense<0.000000e+00> : vector<128x128xf32>
    %16 = tpu.matmul %14, %15, %cst_12 {dimension_numbers = #tpu.dot_dimension_numbers<[1], [0], [0], [1], [0, 0, 1, 1], [], []>} : vector<128x128xbf16>, vector<128x128xbf16>, vector<128x128xf32> -> vector<128x128xf32>
    %c0_13 = arith.constant 0 : index
    %c0_14 = arith.constant 0 : index
    %17 = vector.load %arg7[%c0_13, %c0_14] : memref<1x128xf32, #tpu.memory_space<vmem>>, vector<1x128xf32>
    %18 = vector.broadcast %17 : vector<1x128xf32> to vector<128x128xf32>
    %19 = arith.addf %16, %18 : vector<128x128xf32>
    %20 = arith.truncf %19 : vector<128x128xf32> to vector<128x128xbf16>
    %21 = math.tanh %20 : vector<128x128xbf16>
    %22 = arith.extf %21 : vector<128x128xbf16> to vector<128x128xf32>
    %c0_15 = arith.constant 0 : index
    %c0_16 = arith.constant 0 : index
    %23 = vector.load %arg8[%c0_15, %c0_16] : memref<1x128xf32, #tpu.memory_space<vmem>>, vector<1x128xf32>
    %24 = vector.broadcast %23 : vector<1x128xf32> to vector<128x128xf32>
    %25 = arith.mulf %22, %24 : vector<128x128xf32>
    %26 = vector.shape_cast %25 : vector<128x128xf32> to vector<1x128x128xf32>
    %cst_17 = arith.constant dense<0.000000e+00> : vector<1x128xf32>
    %27 = vector.multi_reduction <add>, %26, %cst_17 [2] : vector<1x128x128xf32> to vector<1x128xf32>
    %c0_18 = arith.constant 0 : index
    %c0_19 = arith.constant 0 : index
    %28 = vector.load %arg9[%c0_18, %c0_19] : memref<1x1xf32, #tpu.memory_space<vmem>>, vector<1x1xf32>
    %29 = vector.broadcast %28 : vector<1x1xf32> to vector<1x128xf32>
    %30 = arith.addf %27, %29 : vector<1x128xf32>
    %c0_20 = arith.constant 0 : index
    %c0_21 = arith.constant 0 : index
    %31 = vector.load %arg10[%c0_20, %c0_21] : memref<1x128xf32, #tpu.memory_space<vmem>>, vector<1x128xf32>
    tpu.vector_store %arg10[%c0_20, %c0_21], %30 {strides = array<i32>} : memref<1x128xf32, #tpu.memory_space<vmem>>, vector<1x128xf32>,
    return
  }
  func.func @transform_0(%arg0: i32) -> (i32, i32) {
    %c0_i32 = arith.constant 0 : i32
    %c0_i32_0 = arith.constant 0 : i32
    return %arg0, %c0_i32 : i32, i32
  }
  func.func @transform_1(%arg0: i32) -> (i32, i32) {
    %c0_i32 = arith.constant 0 : i32
    %c0_i32_0 = arith.constant 0 : i32
    %c0_i32_1 = arith.constant 0 : i32
    return %c0_i32, %c0_i32_0 : i32, i32
  }
  func.func @transform_2(%arg0: i32) -> (i32, i32) {
    %c0_i32 = arith.constant 0 : i32
    %c0_i32_0 = arith.constant 0 : i32
    %c0_i32_1 = arith.constant 0 : i32
    return %c0_i32, %c0_i32_0 : i32, i32
  }
  func.func @transform_3(%arg0: i32) -> (i32, i32) {
    %c0_i32 = arith.constant 0 : i32
    %c0_i32_0 = arith.constant 0 : i32
    %c0_i32_1 = arith.constant 0 : i32
    return %c0_i32, %c0_i32_0 : i32, i32
  }
  func.func @transform_4(%arg0: i32) -> (i32, i32) {
    %c0_i32 = arith.constant 0 : i32
    %c0_i32_0 = arith.constant 0 : i32
    %c0_i32_1 = arith.constant 0 : i32
    return %c0_i32, %c0_i32_0 : i32, i32
  }
  func.func @transform_5(%arg0: i32) -> (i32, i32) {
    %c0_i32 = arith.constant 0 : i32
    %c0_i32_0 = arith.constant 0 : i32
    %c0_i32_1 = arith.constant 0 : i32
    return %c0_i32, %c0_i32_0 : i32, i32
  }
  func.func @transform_6(%arg0: i32) -> (i32, i32) {
    %c0_i32 = arith.constant 0 : i32
    %c0_i32_0 = arith.constant 0 : i32
    %c0_i32_1 = arith.constant 0 : i32
    return %c0_i32, %c0_i32_0 : i32, i32
  }
  func.func @transform_7(%arg0: i32) -> (i32, i32) {
    %c0_i32 = arith.constant 0 : i32
    %c0_i32_0 = arith.constant 0 : i32
    %c0_i32_1 = arith.constant 0 : i32
    return %c0_i32, %c0_i32_0 : i32, i32
  }
  func.func @transform_8(%arg0: i32) -> (i32, i32) {
    %c0_i32 = arith.constant 0 : i32
    %c0_i32_0 = arith.constant 0 : i32
    %c0_i32_1 = arith.constant 0 : i32
    return %c0_i32, %c0_i32_0 : i32, i32
  }
  func.func @transform_9(%arg0: i32) -> (i32, i32) {
    %c0_i32 = arith.constant 0 : i32
    %c0_i32_0 = arith.constant 0 : i32
    return %arg0, %c0_i32 : i32, i32
  }
}

</mosaic_0001>

<llo_original>
// kernel: tpu_custom_call.1
$region0: #{tpu_custom_call.1}
  #allocation0 [shape = 'u32[]', space=smem, size = 0x4, offset = 0x4, fixed_abs, tag = 'smem constant byte address 0x4 - core index']
  #allocation1 [shape = 'u32[144,128]{1,0:T(1,128)}', space=vmem, size = 0x12000, scoped, tag = 'internal scratch']
  #allocation2 [shape = 'f32[1,1]{1,0:T(1,128)S(1)}', space=vmem, size = 0x200, scoped, tag = 'scoped memory for tpu_custom_call.1']
  %s0 = inlined_call_operand.vmem [shape: bf16[128,64], index: 0, kind: input, shape index: {}]
  %s1 = inlined_call_operand.vmem [shape: bf16[64,128], index: 1, kind: input, shape index: {}]
  %s2 = inlined_call_operand.vmem [shape: f32[1,128], index: 2, kind: input, shape index: {}]
  %s3 = inlined_call_operand.vmem [shape: bf16[128,128], index: 3, kind: input, shape index: {}]
  %s4 = inlined_call_operand.vmem [shape: f32[1,128], index: 4, kind: input, shape index: {}]
  %s5 = inlined_call_operand.hbm [shape: bf16[128,128], index: 5, kind: input, shape index: {}]
  %s6 = inlined_call_operand.vmem [shape: f32[1,128], index: 6, kind: input, shape index: {}]
  %s7 = inlined_call_operand.vmem [shape: f32[1,128], index: 7, kind: input, shape index: {}]
  %s8 = inlined_call_operand.<no memory space> [shape: f32[1,1], index: 8, kind: input, shape index: {}]
  %s9 = inlined_call_operand.hbm [shape: f32[1,128], index: 9, kind: output, shape index: {}]
  %s10 = sld [smem:[#allocation0]]
  $region50: #{tpu_custom_call.1} parent=0
    _
  %s12 = ssub.s32 1, %s10
  %s13 = scalar_select 0, %s12, %s10
  %v14 = vstv %s8
  %15 = vst [vmem:[#allocation2] sm:$0x1] %v14
  $region1: #{tpu_custom_call.1} parent=0
    #allocation3 [shape = 'u8[32768]{0}', space=vmem, size = 0x8000, scoped, tag = 'input window, operand 5, single buffered']
    #allocation4 [shape = 's32[1]{0}', space=sflag, size = 0x4, scoped, tag = 'scoped memory for tpu_custom_call.1']
    #allocation5 [shape = 's32[1]{0}', space=sflag, size = 0x4, scoped, tag = 'scoped memory for tpu_custom_call.1']
    #allocation6 [shape = 'u8[512]{0}', space=vmem, size = 0x400, scoped, tag = 'output window, operand 0, single buffered']
    %16 = vsyncpa [#allocation4], 0
    %17 = vsyncpa [#allocation5], 0
    // Predicated region
    $region2: #{tpu_custom_call.1} parent=1 // pred_check
      _
    $region3: #{tpu_custom_call.1} parent=1 // pred_check_branch
      %19 = sbr.rel (0) target = $region5
    $region4: #{tpu_custom_call.1} parent=1 // pred_region
      _
    $region5: #{tpu_custom_call.1} parent=1 // pred_fallthru
      _
    // Predicated region
    $region6: #{tpu_custom_call.1} parent=1 // pred_check
      _
    $region7: #{tpu_custom_call.1} parent=1 // pred_check_branch
      %21 = sbr.rel (0) target = $region9
    $region8: #{tpu_custom_call.1} parent=1 // pred_region
      _
    $region9: #{tpu_custom_call.1} parent=1 // pred_fallthru
      _
    // Predicated region
    $region10: #{tpu_custom_call.1} parent=1 // pred_check
      _
    $region11: #{tpu_custom_call.1} parent=1 // pred_check_branch
      %23 = sbr.rel (0) target = $region13
    $region12: #{tpu_custom_call.1} parent=1 // pred_region
      _
    $region13: #{tpu_custom_call.1} parent=1 // pred_fallthru
      _
    // Predicated region
    $region14: #{tpu_custom_call.1} parent=1 // pred_check
      _
    $region15: #{tpu_custom_call.1} parent=1 // pred_check_branch
      %25 = sbr.rel (0) target = $region17
    $region16: #{tpu_custom_call.1} parent=1 // pred_region
      _
    $region17: #{tpu_custom_call.1} parent=1 // pred_fallthru
      _
    // Predicated region
    $region18: #{tpu_custom_call.1} parent=1 // pred_check
      _
    $region19: #{tpu_custom_call.1} parent=1 // pred_check_branch
      %27 = sbr.rel (0) target = $region21
    $region20: #{tpu_custom_call.1} parent=1 // pred_region
      _
    $region21: #{tpu_custom_call.1} parent=1 // pred_fallthru
      _
    // Predicated region
    $region22: #{tpu_custom_call.1} parent=1 // pred_check
      _
    $region23: #{tpu_custom_call.1} parent=1 // pred_check_branch
      %29 = sbr.rel (0) target = $region25
    $region24: #{tpu_custom_call.1} parent=1 // pred_region
      %s31 = ssub.s32 1024, 1024
      %32 = vsyncadd [#allocation4], %s31
      %s33 = sshll.u32 [#allocation3], 4
      %s34 = int_to_ptr.vmem [resolvable:$true] %s33
      %39 = dma.hbm_to_vmem [thread:$0]  %s5, 1024, %s34, [#allocation4], 64, 64, 4
    $region25: #{tpu_custom_call.1} parent=1 // pred_fallthru
      _
    // Predicated region
    $region26: #{tpu_custom_call.1} parent=1 // pred_check
      _
    $region27: #{tpu_custom_call.1} parent=1 // pred_check_branch
      %41 = sbr.rel (0) target = $region29
    $region28: #{tpu_custom_call.1} parent=1 // pred_region
      _
    $region29: #{tpu_custom_call.1} parent=1 // pred_fallthru
      _
    // Predicated region
    $region30: #{tpu_custom_call.1} parent=1 // pred_check
      _
    $region31: #{tpu_custom_call.1} parent=1 // pred_check_branch
      %43 = sbr.rel (0) target = $region33
    $region32: #{tpu_custom_call.1} parent=1 // pred_region
      _
    $region33: #{tpu_custom_call.1} parent=1 // pred_fallthru
      _
    // Predicated region
    $region34: #{tpu_custom_call.1} parent=1 // pred_check
      _
    $region35: #{tpu_custom_call.1} parent=1 // pred_check_branch
      %45 = sbr.rel (0) target = $region37
    $region36: #{tpu_custom_call.1} parent=1 // pred_region
      _
    $region37: #{tpu_custom_call.1} parent=1 // pred_fallthru
      _
    // Predicated region
    $region38: #{tpu_custom_call.1} parent=1 // pred_check
      _
    $region39: #{tpu_custom_call.1} parent=1 // pred_check_branch
      %47 = sbr.rel (0) target = $region41
    $region40: #{tpu_custom_call.1} parent=1 // pred_region
      %48 = dma.done [#allocation4], 1024
    $region41: #{tpu_custom_call.1} parent=1 // pred_fallthru
      _
    %v50 = vld [vmem:[%s0] sm:$0xf]
    %v51 = vld [vmem:[%s0 + $0x4] sm:$0xf]
    %v52 = vld [vmem:[%s0 + $0x8] sm:$0xf]
    %v53 = vld [vmem:[%s0 + $0xc] sm:$0xf]
    %v54 = vld [vmem:[%s0 + $0x10] sm:$0xf]
    %v55 = vld [vmem:[%s0 + $0x14] sm:$0xf]
    %v56 = vld [vmem:[%s0 + $0x18] sm:$0xf]
    %v57 = vld [vmem:[%s0 + $0x1c] sm:$0xf]
    %v58 = vld [vmem:[%s0 + $0x20] sm:$0xf]
    %v59 = vld [vmem:[%s0 + $0x24] sm:$0xf]
    %v60 = vld [vmem:[%s0 + $0x28] sm:$0xf]
    %v61 = vld [vmem:[%s0 + $0x2c] sm:$0xf]
    %v62 = vld [vmem:[%s0 + $0x30] sm:$0xf]
    %v63 = vld [vmem:[%s0 + $0x34] sm:$0xf]
    %v64 = vld [vmem:[%s0 + $0x38] sm:$0xf]
    %v65 = vld [vmem:[%s0 + $0x3c] sm:$0xf]
    %v66 = vld [vmem:[%s1] sm:$0xf]
    %v67 = vld [vmem:[%s1 + $0x4] sm:$0xf]
    %v68 = vld [vmem:[%s1 + $0x8] sm:$0xf]
    %v69 = vld [vmem:[%s1 + $0xc] sm:$0xf]
    %v70 = vld [vmem:[%s1 + $0x10] sm:$0xf]
    %v71 = vld [vmem:[%s1 + $0x14] sm:$0xf]
    %v72 = vld [vmem:[%s1 + $0x18] sm:$0xf]
    %v73 = vld [vmem:[%s1 + $0x1c] sm:$0xf]
    %v74 = vld [vmem:[%s2] sm:$0x1]
    %v76 = vlaneseq
    %v77 = vshrl.u32 %v76, 7
    %v78 = vsub.s32 0, %v77
    %v79 = vrot.slane %v74, %v78
    %v97 = vunpack.c.l.b16 %v50
    %v98 = vunpack.c.l.b16 %v51
    %v99 = vunpack.c.l.b16 %v52
    %v100 = vunpack.c.l.b16 %v53
    %v101 = vunpack.c.l.b16 %v54
    %v102 = vunpack.c.l.b16 %v55
    %v103 = vunpack.c.l.b16 %v56
    %v104 = vunpack.c.l.b16 %v57
    %v105 = vunpack.c.l.b16 %v58
    %v106 = vunpack.c.l.b16 %v59
    %v107 = vunpack.c.l.b16 %v60
    %v108 = vunpack.c.l.b16 %v61
    %v109 = vunpack.c.l.b16 %v62
    %v110 = vunpack.c.l.b16 %v63
    %v111 = vunpack.c.l.b16 %v64
    %v112 = vunpack.c.l.b16 %v65
    %v113 = vpack.c.b16 %v98, %v97
    %v114 = vpack.c.b16 %v100, %v99
    %v115 = vpack.c.b16 %v102, %v101
    %v116 = vpack.c.b16 %v104, %v103
    %v117 = vpack.c.b16 %v106, %v105
    %v118 = vpack.c.b16 %v108, %v107
    %v119 = vpack.c.b16 %v110, %v109
    %v120 = vpack.c.b16 %v112, %v111
    %v129 = vunpack.c.l.b16 %v66
    %v130 = vunpack.c.l.b16 %v67
    %v131 = vunpack.c.l.b16 %v68
    %v132 = vunpack.c.l.b16 %v69
    %v133 = vunpack.c.l.b16 %v70
    %v134 = vunpack.c.l.b16 %v71
    %v135 = vunpack.c.l.b16 %v72
    %v136 = vunpack.c.l.b16 %v73
    %v137 = vpack.c.b16 %v130, %v129
    %v138 = vpack.c.b16 %v132, %v131
    %v139 = vpack.c.b16 %v134, %v133
    %v140 = vpack.c.b16 %v136, %v135
    %vm145 = vcmask 523264
    %v147 = vsel %vm145, %v113, 0
    %v150 = vsel %vm145, %v114, 0
    %v153 = vsel %vm145, %v115, 0
    %v156 = vsel %vm145, %v116, 0
    %v159 = vsel %vm145, %v117, 0
    %v162 = vsel %vm145, %v118, 0
    %v165 = vsel %vm145, %v119, 0
    %v168 = vsel %vm145, %v120, 0
    %170 = vmatprep.subr.bf16.mxu0 0
    %171 = vmatpush1.bf16.msra.mxu0 0
    %172 = vmatprep.subr.bf16.mxu0 0
    %173 = vmatpush1.bf16.msra.mxu0 0
    %174 = vmatprep.subr.bf16.mxu0 0
    %175 = vmatpush1.bf16.msra.mxu0 0
    %176 = vmatprep.subr.bf16.mxu0 0
    %177 = vmatpush1.bf16.msra.mxu0 0
    %178 = vmatprep.subr.bf16.mxu0 0
    %179 = vmatpush1.bf16.msra.mxu0 %v140
    %180 = vmatprep.subr.bf16.mxu0 0
    %181 = vmatpush1.bf16.msra.mxu0 %v139
    %182 = vmatprep.subr.bf16.mxu0 0
    %183 = vmatpush1.bf16.msra.mxu0 %v138
    %184 = vmatprep.subr.bf16.mxu0 0
    %185 = vmatpush1.bf16.msra.mxu0 %v137
    %186 = vmatprep.subr.bf16.mxu0 0
    %187 = vmatpush2.bf16.msra.mxu0 0
    %188 = vmatprep.subr.bf16.mxu0 0
    %189 = vmatpush2.bf16.msra.mxu0 0
    %190 = vmatprep.subr.bf16.mxu0 0
    %191 = vmatpush2.bf16.msra.mxu0 0
    %192 = vmatprep.subr.bf16.mxu0 0
    %193 = vmatpush2.bf16.msra.mxu0 0
    %194 = vmatprep.subr.bf16.mxu0 0
    %195 = vmatpush2.bf16.msra.mxu0 0
    %196 = vmatprep.subr.bf16.mxu0 0
    %197 = vmatpush2.bf16.msra.mxu0 0
    %198 = vmatprep.subr.bf16.mxu0 0
    %199 = vmatpush2.bf16.msra.mxu0 0
    %200 = vmatprep.subr.bf16.mxu0 0
    %201 = vmatpush2.bf16.msra.mxu0 0
    %202 = vmatprep.mubr.bf16.mxu0 0
    %203 = vmatmul.mubr.bf16.gmra.mxu0 %v147
    %v204 = vpop.f32.mrf.mxu0
    %v205 = vadd.f32 %v79, %v204
    %v206 = vpop.f32.mrf.mxu0
    %v207 = vpop.f32.mrf.mxu0
    %v208 = vadd.f32 %v79, %v207
    %v209 = vpop.f32.mrf.mxu0
    %210 = vmatprep.mubr.bf16.mxu0 0
    %211 = vmatmul.mubr.bf16.gmra.mxu0 %v150
    %v212 = vpop.f32.mrf.mxu0
    %v213 = vadd.f32 %v79, %v212
    %v214 = vpop.f32.mrf.mxu0
    %v215 = vpop.f32.mrf.mxu0
    %v216 = vadd.f32 %v79, %v215
    %v217 = vpop.f32.mrf.mxu0
    %218 = vmatprep.mubr.bf16.mxu0 0
    %219 = vmatmul.mubr.bf16.gmra.mxu0 %v153
    %v220 = vpop.f32.mrf.mxu0
    %v221 = vadd.f32 %v79, %v220
    %v222 = vpop.f32.mrf.mxu0
    %v223 = vpop.f32.mrf.mxu0
    %v224 = vadd.f32 %v79, %v223
    %v225 = vpop.f32.mrf.mxu0
    %226 = vmatprep.mubr.bf16.mxu0 0
    %227 = vmatmul.mubr.bf16.gmra.mxu0 %v156
    %v228 = vpop.f32.mrf.mxu0
    %v229 = vadd.f32 %v79, %v228
    %v230 = vpop.f32.mrf.mxu0
    %v231 = vpop.f32.mrf.mxu0
    %v232 = vadd.f32 %v79, %v231
    %v233 = vpop.f32.mrf.mxu0
    %234 = vmatprep.mubr.bf16.mxu0 0
    %235 = vmatmul.mubr.bf16.gmra.mxu0 %v159
    %v236 = vpop.f32.mrf.mxu0
    %v237 = vadd.f32 %v79, %v236
    %v238 = vpop.f32.mrf.mxu0
    %v239 = vpop.f32.mrf.mxu0
    %v240 = vadd.f32 %v79, %v239
    %v241 = vpop.f32.mrf.mxu0
    %242 = vmatprep.mubr.bf16.mxu0 0
    %243 = vmatmul.mubr.bf16.gmra.mxu0 %v162
    %v244 = vpop.f32.mrf.mxu0
    %v245 = vadd.f32 %v79, %v244
    %v246 = vpop.f32.mrf.mxu0
    %v247 = vpop.f32.mrf.mxu0
    %v248 = vadd.f32 %v79, %v247
    %v249 = vpop.f32.mrf.mxu0
    %250 = vmatprep.mubr.bf16.mxu0 0
    %251 = vmatmul.mubr.bf16.gmra.mxu0 %v165
    %v252 = vpop.f32.mrf.mxu0
    %v253 = vadd.f32 %v79, %v252
    %v254 = vpop.f32.mrf.mxu0
    %v255 = vpop.f32.mrf.mxu0
    %v256 = vadd.f32 %v79, %v255
    %v257 = vpop.f32.mrf.mxu0
    %258 = vmatprep.mubr.bf16.mxu0 0
    %259 = vmatmul.mubr.bf16.gmra.mxu0 %v168
    %v260 = vpop.f32.mrf.mxu0
    %v261 = vadd.f32 %v79, %v260
    %v262 = vpop.f32.mrf.mxu0
    %v263 = vpop.f32.mrf.mxu0
    %v264 = vadd.f32 %v79, %v263
    %v265 = vpop.f32.mrf.mxu0
    %266 = vdwg.mxu0
    %v267 = vpack.c.bf16 %v208, %v205
    %v268 = vpack.c.bf16 %v216, %v213
    %v269 = vpack.c.bf16 %v224, %v221
    %v270 = vpack.c.bf16 %v232, %v229
    %v271 = vpack.c.bf16 %v240, %v237
    %v272 = vpack.c.bf16 %v248, %v245
    %v273 = vpack.c.bf16 %v256, %v253
    %v274 = vpack.c.bf16 %v264, %v261
    %v275 = vtanh.bf16.pop %v267
    %v276 = vtanh.bf16.pop %v268
    %v277 = vtanh.bf16.pop %v269
    %v278 = vtanh.bf16.pop %v270
    %v279 = vtanh.bf16.pop %v271
    %v280 = vtanh.bf16.pop %v272
    %v281 = vtanh.bf16.pop %v273
    %v282 = vtanh.bf16.pop %v274
    %v283 = vld [vmem:[%s3] sm:$0xf]
    %v284 = vld [vmem:[%s3 + $0x4] sm:$0xf]
    %v285 = vld [vmem:[%s3 + $0x8] sm:$0xf]
    %v286 = vld [vmem:[%s3 + $0xc] sm:$0xf]
    %v287 = vld [vmem:[%s3 + $0x10] sm:$0xf]
    %v288 = vld [vmem:[%s3 + $0x14] sm:$0xf]
    %v289 = vld [vmem:[%s3 + $0x18] sm:$0xf]
    %v290 = vld [vmem:[%s3 + $0x1c] sm:$0xf]
    %v291 = vld [vmem:[%s3 + $0x20] sm:$0xf]
    %v292 = vld [vmem:[%s3 + $0x24] sm:$0xf]
    %v293 = vld [vmem:[%s3 + $0x28] sm:$0xf]
    %v294 = vld [vmem:[%s3 + $0x2c] sm:$0xf]
    %v295 = vld [vmem:[%s3 + $0x30] sm:$0xf]
    %v296 = vld [vmem:[%s3 + $0x34] sm:$0xf]
    %v297 = vld [vmem:[%s3 + $0x38] sm:$0xf]
    %v298 = vld [vmem:[%s3 + $0x3c] sm:$0xf]
    %v299 = vld [vmem:[%s4] sm:$0x1]
    %v301 = vlaneseq
    %v302 = vshrl.u32 %v301, 7
    %v303 = vsub.s32 0, %v302
    %v304 = vrot.slane %v299, %v303
    %v322 = vunpack.c.l.b16 %v283
    %v323 = vunpack.c.l.b16 %v284
    %v324 = vunpack.c.l.b16 %v285
    %v325 = vunpack.c.l.b16 %v286
    %v326 = vunpack.c.l.b16 %v287
    %v327 = vunpack.c.l.b16 %v288
    %v328 = vunpack.c.l.b16 %v289
    %v329 = vunpack.c.l.b16 %v290
    %v330 = vunpack.c.l.b16 %v291
    %v331 = vunpack.c.l.b16 %v292
    %v332 = vunpack.c.l.b16 %v293
    %v333 = vunpack.c.l.b16 %v294
    %v334 = vunpack.c.l.b16 %v295
    %v335 = vunpack.c.l.b16 %v296
    %v336 = vunpack.c.l.b16 %v297
    %v337 = vunpack.c.l.b16 %v298
    %v338 = vpack.c.b16 %v323, %v322
    %v339 = vpack.c.b16 %v325, %v324
    %v340 = vpack.c.b16 %v327, %v326
    %v341 = vpack.c.b16 %v329, %v328
    %v342 = vpack.c.b16 %v331, %v330
    %v343 = vpack.c.b16 %v333, %v332
    %v344 = vpack.c.b16 %v335, %v334
    %v345 = vpack.c.b16 %v337, %v336
    %354 = vmatprep.subr.bf16.mxu0 0
    %355 = vmatpush1.bf16.msra.mxu0 %v345
    %356 = vmatprep.subr.bf16.mxu0 0
    %357 = vmatpush1.bf16.msra.mxu0 %v344
    %358 = vmatprep.subr.bf16.mxu0 0
    %359 = vmatpush1.bf16.msra.mxu0 %v343
    %360 = vmatprep.subr.bf16.mxu0 0
    %361 = vmatpush1.bf16.msra.mxu0 %v342
    %362 = vmatprep.subr.bf16.mxu0 0
    %363 = vmatpush1.bf16.msra.mxu0 %v341
    %364 = vmatprep.subr.bf16.mxu0 0
    %365 = vmatpush1.bf16.msra.mxu0 %v340
    %366 = vmatprep.subr.bf16.mxu0 0
    %367 = vmatpush1.bf16.msra.mxu0 %v339
    %368 = vmatprep.subr.bf16.mxu0 0
    %369 = vmatpush1.bf16.msra.mxu0 %v338
    %370 = vmatprep.subr.bf16.mxu0 0
    %371 = vmatpush2.bf16.msra.mxu0 0
    %372 = vmatprep.subr.bf16.mxu0 0
    %373 = vmatpush2.bf16.msra.mxu0 0
    %374 = vmatprep.subr.bf16.mxu0 0
    %375 = vmatpush2.bf16.msra.mxu0 0
    %376 = vmatprep.subr.bf16.mxu0 0
    %377 = vmatpush2.bf16.msra.mxu0 0
    %378 = vmatprep.subr.bf16.mxu0 0
    %379 = vmatpush2.bf16.msra.mxu0 0
    %380 = vmatprep.subr.bf16.mxu0 0
    %381 = vmatpush2.bf16.msra.mxu0 0
    %382 = vmatprep.subr.bf16.mxu0 0
    %383 = vmatpush2.bf16.msra.mxu0 0
    %384 = vmatprep.subr.bf16.mxu0 0
    %385 = vmatpush2.bf16.msra.mxu0 0
    %386 = vmatprep.mubr.bf16.mxu0 0
    %387 = vmatmul.mubr.bf16.gmra.mxu0 %v275
    %v388 = vpop.f32.mrf.mxu0
    %v389 = vadd.f32 %v304, %v388
    %v390 = vpop.f32.mrf.mxu0
    %v391 = vpop.f32.mrf.mxu0
    %v392 = vadd.f32 %v304, %v391
    %v393 = vpop.f32.mrf.mxu0
    %394 = vmatprep.mubr.bf16.mxu0 0
    %395 = vmatmul.mubr.bf16.gmra.mxu0 %v276
    %v396 = vpop.f32.mrf.mxu0
    %v397 = vadd.f32 %v304, %v396
    %v398 = vpop.f32.mrf.mxu0
    %v399 = vpop.f32.mrf.mxu0
    %v400 = vadd.f32 %v304, %v399
    %v401 = vpop.f32.mrf.mxu0
    %402 = vmatprep.mubr.bf16.mxu0 0
    %403 = vmatmul.mubr.bf16.gmra.mxu0 %v277
    %v404 = vpop.f32.mrf.mxu0
    %v405 = vadd.f32 %v304, %v404
    %v406 = vpop.f32.mrf.mxu0
    %v407 = vpop.f32.mrf.mxu0
    %v408 = vadd.f32 %v304, %v407
    %v409 = vpop.f32.mrf.mxu0
    %410 = vmatprep.mubr.bf16.mxu0 0
    %411 = vmatmul.mubr.bf16.gmra.mxu0 %v278
    %v412 = vpop.f32.mrf.mxu0
    %v413 = vadd.f32 %v304, %v412
    %v414 = vpop.f32.mrf.mxu0
    %v415 = vpop.f32.mrf.mxu0
    %v416 = vadd.f32 %v304, %v415
    %v417 = vpop.f32.mrf.mxu0
    %418 = vmatprep.mubr.bf16.mxu0 0
    %419 = vmatmul.mubr.bf16.gmra.mxu0 %v279
    %v420 = vpop.f32.mrf.mxu0
    %v421 = vadd.f32 %v304, %v420
    %v422 = vpop.f32.mrf.mxu0
    %v423 = vpop.f32.mrf.mxu0
    %v424 = vadd.f32 %v304, %v423
    %v425 = vpop.f32.mrf.mxu0
    %426 = vmatprep.mubr.bf16.mxu0 0
    %427 = vmatmul.mubr.bf16.gmra.mxu0 %v280
    %v428 = vpop.f32.mrf.mxu0
    %v429 = vadd.f32 %v304, %v428
    %v430 = vpop.f32.mrf.mxu0
    %v431 = vpop.f32.mrf.mxu0
    %v432 = vadd.f32 %v304, %v431
    %v433 = vpop.f32.mrf.mxu0
    %434 = vmatprep.mubr.bf16.mxu0 0
    %435 = vmatmul.mubr.bf16.gmra.mxu0 %v281
    %v436 = vpop.f32.mrf.mxu0
    %v437 = vadd.f32 %v304, %v436
    %v438 = vpop.f32.mrf.mxu0
    %v439 = vpop.f32.mrf.mxu0
    %v440 = vadd.f32 %v304, %v439
    %v441 = vpop.f32.mrf.mxu0
    %442 = vmatprep.mubr.bf16.mxu0 0
    %443 = vmatmul.mubr.bf16.gmra.mxu0 %v282
    %v444 = vpop.f32.mrf.mxu0
    %v445 = vadd.f32 %v304, %v444
    %v446 = vpop.f32.mrf.mxu0
    %v447 = vpop.f32.mrf.mxu0
    %v448 = vadd.f32 %v304, %v447
    %v449 = vpop.f32.mrf.mxu0
    %450 = vdwg.mxu0
    %v451 = vpack.c.bf16 %v392, %v389
    %v452 = vpack.c.bf16 %v400, %v397
    %v453 = vpack.c.bf16 %v408, %v405
    %v454 = vpack.c.bf16 %v416, %v413
    %v455 = vpack.c.bf16 %v424, %v421
    %v456 = vpack.c.bf16 %v432, %v429
    %v457 = vpack.c.bf16 %v440, %v437
    %v458 = vpack.c.bf16 %v448, %v445
    %v459 = vtanh.bf16.pop %v451
    %v460 = vtanh.bf16.pop %v452
    %v461 = vtanh.bf16.pop %v453
    %v462 = vtanh.bf16.pop %v454
    %v463 = vtanh.bf16.pop %v455
    %v464 = vtanh.bf16.pop %v456
    %v465 = vtanh.bf16.pop %v457
    %v466 = vtanh.bf16.pop %v458
    %v467 = vld [vmem:[#allocation3] sm:$0xf]
    %v468 = vld [vmem:[#allocation3 + $0x4] sm:$0xf]
    %v469 = vld [vmem:[#allocation3 + $0x8] sm:$0xf]
    %v470 = vld [vmem:[#allocation3 + $0xc] sm:$0xf]
    %v471 = vld [vmem:[#allocation3 + $0x10] sm:$0xf]
    %v472 = vld [vmem:[#allocation3 + $0x14] sm:$0xf]
    %v473 = vld [vmem:[#allocation3 + $0x18] sm:$0xf]
    %v474 = vld [vmem:[#allocation3 + $0x1c] sm:$0xf]
    %v475 = vld [vmem:[#allocation3 + $0x20] sm:$0xf]
    %v476 = vld [vmem:[#allocation3 + $0x24] sm:$0xf]
    %v477 = vld [vmem:[#allocation3 + $0x28] sm:$0xf]
    %v478 = vld [vmem:[#allocation3 + $0x2c] sm:$0xf]
    %v479 = vld [vmem:[#allocation3 + $0x30] sm:$0xf]
    %v480 = vld [vmem:[#allocation3 + $0x34] sm:$0xf]
    %v481 = vld [vmem:[#allocation3 + $0x38] sm:$0xf]
    %v482 = vld [vmem:[#allocation3 + $0x3c] sm:$0xf]
    %v483 = vld [vmem:[%s6] sm:$0x1]
    %v485 = vlaneseq
    %v486 = vshrl.u32 %v485, 7
    %v487 = vsub.s32 0, %v486
    %v488 = vrot.slane %v483, %v487
    %v506 = vunpack.c.l.b16 %v467
    %v507 = vunpack.c.l.b16 %v468
    %v508 = vunpack.c.l.b16 %v469
    %v509 = vunpack.c.l.b16 %v470
    %v510 = vunpack.c.l.b16 %v471
    %v511 = vunpack.c.l.b16 %v472
    %v512 = vunpack.c.l.b16 %v473
    %v513 = vunpack.c.l.b16 %v474
    %v514 = vunpack.c.l.b16 %v475
    %v515 = vunpack.c.l.b16 %v476
    %v516 = vunpack.c.l.b16 %v477
    %v517 = vunpack.c.l.b16 %v478
    %v518 = vunpack.c.l.b16 %v479
    %v519 = vunpack.c.l.b16 %v480
    %v520 = vunpack.c.l.b16 %v481
    %v521 = vunpack.c.l.b16 %v482
    %v522 = vpack.c.b16 %v507, %v506
    %v523 = vpack.c.b16 %v509, %v508
    %v524 = vpack.c.b16 %v511, %v510
    %v525 = vpack.c.b16 %v513, %v512
    %v526 = vpack.c.b16 %v515, %v514
    %v527 = vpack.c.b16 %v517, %v516
    %v528 = vpack.c.b16 %v519, %v518
    %v529 = vpack.c.b16 %v521, %v520
    %538 = vmatprep.subr.bf16.mxu0 0
    %539 = vmatpush1.bf16.msra.mxu0 %v529
    %540 = vmatprep.subr.bf16.mxu0 0
    %541 = vmatpush1.bf16.msra.mxu0 %v528
    %542 = vmatprep.subr.bf16.mxu0 0
    %543 = vmatpush1.bf16.msra.mxu0 %v527
    %544 = vmatprep.subr.bf16.mxu0 0
    %545 = vmatpush1.bf16.msra.mxu0 %v526
    %546 = vmatprep.subr.bf16.mxu0 0
    %547 = vmatpush1.bf16.msra.mxu0 %v525
    %548 = vmatprep.subr.bf16.mxu0 0
    %549 = vmatpush1.bf16.msra.mxu0 %v524
    %550 = vmatprep.subr.bf16.mxu0 0
    %551 = vmatpush1.bf16.msra.mxu0 %v523
    %552 = vmatprep.subr.bf16.mxu0 0
    %553 = vmatpush1.bf16.msra.mxu0 %v522
    %554 = vmatprep.subr.bf16.mxu0 0
    %555 = vmatpush2.bf16.msra.mxu0 0
    %556 = vmatprep.subr.bf16.mxu0 0
    %557 = vmatpush2.bf16.msra.mxu0 0
    %558 = vmatprep.subr.bf16.mxu0 0
    %559 = vmatpush2.bf16.msra.mxu0 0
    %560 = vmatprep.subr.bf16.mxu0 0
    %561 = vmatpush2.bf16.msra.mxu0 0
    %562 = vmatprep.subr.bf16.mxu0 0
    %563 = vmatpush2.bf16.msra.mxu0 0
    %564 = vmatprep.subr.bf16.mxu0 0
    %565 = vmatpush2.bf16.msra.mxu0 0
    %566 = vmatprep.subr.bf16.mxu0 0
    %567 = vmatpush2.bf16.msra.mxu0 0
    %568 = vmatprep.subr.bf16.mxu0 0
    %569 = vmatpush2.bf16.msra.mxu0 0
    %570 = vmatprep.mubr.bf16.mxu0 0
    %571 = vmatmul.mubr.bf16.gmra.mxu0 %v459
    %v572 = vpop.f32.mrf.mxu0
    %v573 = vadd.f32 %v488, %v572
    %v574 = vpop.f32.mrf.mxu0
    %v575 = vpop.f32.mrf.mxu0
    %v576 = vadd.f32 %v488, %v575
    %v577 = vpop.f32.mrf.mxu0
    %578 = vmatprep.mubr.bf16.mxu0 0
    %579 = vmatmul.mubr.bf16.gmra.mxu0 %v460
    %v580 = vpop.f32.mrf.mxu0
    %v581 = vadd.f32 %v488, %v580
    %v582 = vpop.f32.mrf.mxu0
    %v583 = vpop.f32.mrf.mxu0
    %v584 = vadd.f32 %v488, %v583
    %v585 = vpop.f32.mrf.mxu0
    %586 = vmatprep.mubr.bf16.mxu0 0
    %587 = vmatmul.mubr.bf16.gmra.mxu0 %v461
    %v588 = vpop.f32.mrf.mxu0
    %v589 = vadd.f32 %v488, %v588
    %v590 = vpop.f32.mrf.mxu0
    %v591 = vpop.f32.mrf.mxu0
    %v592 = vadd.f32 %v488, %v591
    %v593 = vpop.f32.mrf.mxu0
    %594 = vmatprep.mubr.bf16.mxu0 0
    %595 = vmatmul.mubr.bf16.gmra.mxu0 %v462
    %v596 = vpop.f32.mrf.mxu0
    %v597 = vadd.f32 %v488, %v596
    %v598 = vpop.f32.mrf.mxu0
    %v599 = vpop.f32.mrf.mxu0
    %v600 = vadd.f32 %v488, %v599
    %v601 = vpop.f32.mrf.mxu0
    %602 = vmatprep.mubr.bf16.mxu0 0
    %603 = vmatmul.mubr.bf16.gmra.mxu0 %v463
    %v604 = vpop.f32.mrf.mxu0
    %v605 = vadd.f32 %v488, %v604
    %v606 = vpop.f32.mrf.mxu0
    %v607 = vpop.f32.mrf.mxu0
    %v608 = vadd.f32 %v488, %v607
    %v609 = vpop.f32.mrf.mxu0
    %610 = vmatprep.mubr.bf16.mxu0 0
    %611 = vmatmul.mubr.bf16.gmra.mxu0 %v464
    %v612 = vpop.f32.mrf.mxu0
    %v613 = vadd.f32 %v488, %v612
    %v614 = vpop.f32.mrf.mxu0
    %v615 = vpop.f32.mrf.mxu0
    %v616 = vadd.f32 %v488, %v615
    %v617 = vpop.f32.mrf.mxu0
    %618 = vmatprep.mubr.bf16.mxu0 0
    %619 = vmatmul.mubr.bf16.gmra.mxu0 %v465
    %v620 = vpop.f32.mrf.mxu0
    %v621 = vadd.f32 %v488, %v620
    %v622 = vpop.f32.mrf.mxu0
    %v623 = vpop.f32.mrf.mxu0
    %v624 = vadd.f32 %v488, %v623
    %v625 = vpop.f32.mrf.mxu0
    %626 = vmatprep.mubr.bf16.mxu0 0
    %627 = vmatmul.mubr.bf16.gmra.mxu0 %v466
    %v628 = vpop.f32.mrf.mxu0
    %v629 = vadd.f32 %v488, %v628
    %v630 = vpop.f32.mrf.mxu0
    %v631 = vpop.f32.mrf.mxu0
    %v632 = vadd.f32 %v488, %v631
    %v633 = vpop.f32.mrf.mxu0
    %634 = vdwg.mxu0
    %v635 = vpack.c.bf16 %v576, %v573
    %v636 = vpack.c.bf16 %v584, %v581
    %v637 = vpack.c.bf16 %v592, %v589
    %v638 = vpack.c.bf16 %v600, %v597
    %v639 = vpack.c.bf16 %v608, %v605
    %v640 = vpack.c.bf16 %v616, %v613
    %v641 = vpack.c.bf16 %v624, %v621
    %v642 = vpack.c.bf16 %v632, %v629
    %v643 = vtanh.bf16.pop %v635
    %v644 = vtanh.bf16.pop %v636
    %v645 = vtanh.bf16.pop %v637
    %v646 = vtanh.bf16.pop %v638
    %v647 = vtanh.bf16.pop %v639
    %v648 = vtanh.bf16.pop %v640
    %v649 = vtanh.bf16.pop %v641
    %v650 = vtanh.bf16.pop %v642
    %v651 = vunpack.c.l.bf16 %v643
    %v652 = vunpack.c.h.bf16 %v643
    %v653 = vunpack.c.l.bf16 %v644
    %v654 = vunpack.c.h.bf16 %v644
    %v655 = vunpack.c.l.bf16 %v645
    %v656 = vunpack.c.h.bf16 %v645
    %v657 = vunpack.c.l.bf16 %v646
    %v658 = vunpack.c.h.bf16 %v646
    %v659 = vunpack.c.l.bf16 %v647
    %v660 = vunpack.c.h.bf16 %v647
    %v661 = vunpack.c.l.bf16 %v648
    %v662 = vunpack.c.h.bf16 %v648
    %v663 = vunpack.c.l.bf16 %v649
    %v664 = vunpack.c.h.bf16 %v649
    %v665 = vunpack.c.l.bf16 %v650
    %v666 = vunpack.c.h.bf16 %v650
    %v667 = vld [vmem:[%s7] sm:$0x1]
    %v669 = vlaneseq
    %v670 = vshrl.u32 %v669, 7
    %v671 = vsub.s32 0, %v670
    %v672 = vrot.slane %v667, %v671
    %v674 = vmul.f32 %v651, %v672
    %v675 = vmul.f32 %v652, %v672
    %v676 = vmul.f32 %v653, %v672
    %v677 = vmul.f32 %v654, %v672
    %v678 = vmul.f32 %v655, %v672
    %v679 = vmul.f32 %v656, %v672
    %v680 = vmul.f32 %v657, %v672
    %v681 = vmul.f32 %v658, %v672
    %v682 = vmul.f32 %v659, %v672
    %v683 = vmul.f32 %v660, %v672
    %v684 = vmul.f32 %v661, %v672
    %v685 = vmul.f32 %v662, %v672
    %v686 = vmul.f32 %v663, %v672
    %v687 = vmul.f32 %v664, %v672
    %v688 = vmul.f32 %v665, %v672
    %v689 = vmul.f32 %v666, %v672
    %690 = vadd.xlane.f32.xlu0 %v674
    %v691 = vpop.xlane.xlu0 %690
    %692 = vadd.xlane.f32.xlu0 %v675
    %v693 = vpop.xlane.xlu0 %692
    %694 = vadd.xlane.f32.xlu0 %v676
    %v695 = vpop.xlane.xlu0 %694
    %696 = vadd.xlane.f32.xlu0 %v677
    %v697 = vpop.xlane.xlu0 %696
    %698 = vadd.xlane.f32.xlu0 %v678
    %v699 = vpop.xlane.xlu0 %698
    %700 = vadd.xlane.f32.xlu0 %v679
    %v701 = vpop.xlane.xlu0 %700
    %702 = vadd.xlane.f32.xlu0 %v680
    %v703 = vpop.xlane.xlu0 %702
    %704 = vadd.xlane.f32.xlu0 %v681
    %v705 = vpop.xlane.xlu0 %704
    %706 = vadd.xlane.f32.xlu0 %v682
    %v707 = vpop.xlane.xlu0 %706
    %708 = vadd.xlane.f32.xlu0 %v683
    %v709 = vpop.xlane.xlu0 %708
    %710 = vadd.xlane.f32.xlu0 %v684
    %v711 = vpop.xlane.xlu0 %710
    %712 = vadd.xlane.f32.xlu0 %v685
    %v713 = vpop.xlane.xlu0 %712
    %714 = vadd.xlane.f32.xlu0 %v686
    %v715 = vpop.xlane.xlu0 %714
    %716 = vadd.xlane.f32.xlu0 %v687
    %v717 = vpop.xlane.xlu0 %716
    %718 = vadd.xlane.f32.xlu0 %v688
    %v719 = vpop.xlane.xlu0 %718
    %720 = vadd.xlane.f32.xlu0 %v689
    %v721 = vpop.xlane.xlu0 %720
    %v722 = vld [vmem:[#allocation2] sm:$0x1]
    %724 = vset.pattern.permute.xlu0 0
    %725 = vperm.xlu0 %724, %v722
    %v726 = vpop.permute.xlu0 %725
    %v728 = vlaneseq
    %v729 = vshrl.u32 %v728, 7
    %v730 = vsub.s32 0, %v729
    %v731 = vrot.slane %v726, %v730
    %v732 = vadd.f32 %v691, %v731
    %v733 = vadd.f32 %v693, %v731
    %v734 = vadd.f32 %v695, %v731
    %v735 = vadd.f32 %v697, %v731
    %v736 = vadd.f32 %v699, %v731
    %v737 = vadd.f32 %v701, %v731
    %v738 = vadd.f32 %v703, %v731
    %v739 = vadd.f32 %v705, %v731
    %v740 = vadd.f32 %v707, %v731
    %v741 = vadd.f32 %v709, %v731
    %v742 = vadd.f32 %v711, %v731
    %v743 = vadd.f32 %v713, %v731
    %v744 = vadd.f32 %v715, %v731
    %v745 = vadd.f32 %v717, %v731
    %v746 = vadd.f32 %v719, %v731
    %v747 = vadd.f32 %v721, %v731
    %v764 = vlaneseq
    %v765 = vand.u32 %v764, 127
    %v766 = vlaneseq
    %v767 = vshrl.u32 %v766, 7
    %v768 = vsub.s32 %v765, %v767
    %v769 = vrot.slane %v732, %v768
    %v770 = vadd.s32 %v765, 4294967288
    %v771 = vlaneseq
    %v772 = vshrl.u32 %v771, 7
    %v773 = vsub.s32 %v770, %v772
    %v774 = vrot.slane %v733, %v773
    %vm775 = vcmask 130112
    %v776 = vsel %vm775, %v774, %v769
    %v777 = vadd.s32 %v765, 4294967280
    %v778 = vlaneseq
    %v779 = vshrl.u32 %v778, 7
    %v780 = vsub.s32 %v777, %v779
    %v781 = vrot.slane %v734, %v780
    %vm782 = vcmask 195712
    %v783 = vsel %vm782, %v781, %v776
    %v784 = vadd.s32 %v765, 4294967272
    %v785 = vlaneseq
    %v786 = vshrl.u32 %v785, 7
    %v787 = vsub.s32 %v784, %v786
    %v788 = vrot.slane %v735, %v787
    %vm789 = vcmask 261312
    %v790 = vsel %vm789, %v788, %v783
    %v791 = vadd.s32 %v765, 4294967264
    %v792 = vlaneseq
    %v793 = vshrl.u32 %v792, 7
    %v794 = vsub.s32 %v791, %v793
    %v795 = vrot.slane %v736, %v794
    %vm796 = vcmask 326912
    %v797 = vsel %vm796, %v795, %v790
    %v798 = vadd.s32 %v765, 4294967256
    %v799 = vlaneseq
    %v800 = vshrl.u32 %v799, 7
    %v801 = vsub.s32 %v798, %v800
    %v802 = vrot.slane %v737, %v801
    %vm803 = vcmask 392512
    %v804 = vsel %vm803, %v802, %v797
    %v805 = vadd.s32 %v765, 4294967248
    %v806 = vlaneseq
    %v807 = vshrl.u32 %v806, 7
    %v808 = vsub.s32 %v805, %v807
    %v809 = vrot.slane %v738, %v808
    %vm810 = vcmask 458112
    %v811 = vsel %vm810, %v809, %v804
    %v812 = vadd.s32 %v765, 4294967240
    %v813 = vlaneseq
    %v814 = vshrl.u32 %v813, 7
    %v815 = vsub.s32 %v812, %v814
    %v816 = vrot.slane %v739, %v815
    %vm817 = vcmask 523712
    %v818 = vsel %vm817, %v816, %v811
    %v819 = vadd.s32 %v765, 4294967232
    %v820 = vlaneseq
    %v821 = vshrl.u32 %v820, 7
    %v822 = vsub.s32 %v819, %v821
    %v823 = vrot.slane %v740, %v822
    %vm824 = vcmask 589312
    %v825 = vsel %vm824, %v823, %v818
    %v826 = vadd.s32 %v765, 4294967224
    %v827 = vlaneseq
    %v828 = vshrl.u32 %v827, 7
    %v829 = vsub.s32 %v826, %v828
    %v830 = vrot.slane %v741, %v829
    %vm831 = vcmask 654912
    %v832 = vsel %vm831, %v830, %v825
    %v833 = vadd.s32 %v765, 4294967216
    %v834 = vlaneseq
    %v835 = vshrl.u32 %v834, 7
    %v836 = vsub.s32 %v833, %v835
    %v837 = vrot.slane %v742, %v836
    %vm838 = vcmask 720512
    %v839 = vsel %vm838, %v837, %v832
    %v840 = vadd.s32 %v765, 4294967208
    %v841 = vlaneseq
    %v842 = vshrl.u32 %v841, 7
    %v843 = vsub.s32 %v840, %v842
    %v844 = vrot.slane %v743, %v843
    %vm845 = vcmask 786112
    %v846 = vsel %vm845, %v844, %v839
    %v847 = vadd.s32 %v765, 4294967200
    %v848 = vlaneseq
    %v849 = vshrl.u32 %v848, 7
    %v850 = vsub.s32 %v847, %v849
    %v851 = vrot.slane %v744, %v850
    %vm852 = vcmask 851712
    %v853 = vsel %vm852, %v851, %v846
    %v854 = vadd.s32 %v765, 4294967192
    %v855 = vlaneseq
    %v856 = vshrl.u32 %v855, 7
    %v857 = vsub.s32 %v854, %v856
    %v858 = vrot.slane %v745, %v857
    %vm859 = vcmask 917312
    %v860 = vsel %vm859, %v858, %v853
    %v861 = vadd.s32 %v765, 4294967184
    %v862 = vlaneseq
    %v863 = vshrl.u32 %v862, 7
    %v864 = vsub.s32 %v861, %v863
    %v865 = vrot.slane %v746, %v864
    %vm866 = vcmask 982912
    %v867 = vsel %vm866, %v865, %v860
    %v868 = vadd.s32 %v765, 4294967176
    %v869 = vlaneseq
    %v870 = vshrl.u32 %v869, 7
    %v871 = vsub.s32 %v868, %v870
    %v872 = vrot.slane %v747, %v871
    %vm873 = vcmask 1048512
    %v874 = vsel %vm873, %v872, %v867
    %876 = vst [vmem:[#allocation6] sm:$0x1] %v874
    // Predicated region
    $region42: #{tpu_custom_call.1} parent=1 // pred_check
      _
    $region43: #{tpu_custom_call.1} parent=1 // pred_check_branch
      %878 = sbr.rel (0) target = $region45
    $region44: #{tpu_custom_call.1} parent=1 // pred_region
      %s880 = ssub.s32 16, 16
      %881 = vsyncadd [#allocation5], %s880
      %s883 = sshll.u32 [#allocation6], 4
      %s884 = int_to_ptr.vmem [resolvable:$true] %s883
      %886 = dma.vmem_to_hbm [thread:$0]  %s884, 16, %s9, [#allocation5]
    $region45: #{tpu_custom_call.1} parent=1 // pred_fallthru
      _
    // Predicated region
    $region46: #{tpu_custom_call.1} parent=1 // pred_check
      _
    $region47: #{tpu_custom_call.1} parent=1 // pred_check_branch
      %888 = sbr.rel (0) target = $region49
    $region48: #{tpu_custom_call.1} parent=1 // pred_region
      %889 = dma.done [#allocation5], 16
    $region49: #{tpu_custom_call.1} parent=1 // pred_fallthru
      _
    %890 = vsyncpa [#allocation4], 1
    %891 = vsyncpa [#allocation5], 1

</llo_original>
